<compile_context>
chip_gen: v7x
topology: tpu7x:2x2x1
jax: 0.10.0
libtpu: 0.0.40
codegen_flags: <defaults>
</compile_context>

<pallas_src>
import jax
import jax.numpy as jnp
from jax.experimental import pallas as pl
from jax.experimental.pallas import tpu as pltpu


def _predictor_kernel(
    sa_ref,     # (s_dim + a_dim, tn)   activations (compute dtype)
    win_ref,    # (2*hidden, s_dim + a_dim)  block-diag [Ws1, 0; 0, Wa1]
    bin_ref,    # (2*hidden, 1) f32
    w1_ref,     # (hidden, 2*hidden)
    b1_ref,     # (hidden, 1) f32
    w2_ref,     # (s_dim, hidden)
    b2_ref,     # (s_dim, 1) f32
    out_ref,    # (s_dim, tn)
):
    # Fused first layer (fcs1 + fca1) + relu: single MXU dot, f32 accumulate.
    cat = jnp.maximum(
        jnp.dot(win_ref[...], sa_ref[...], preferred_element_type=jnp.float32)
        + bin_ref[...],
        0.0,
    )

    # fc1 + relu: (hidden, 2*hidden) @ (2*hidden, tn) -> (hidden, tn)
    s3 = jnp.maximum(
        jnp.dot(w1_ref[...], cat.astype(w1_ref.dtype),
                preferred_element_type=jnp.float32)
        + b1_ref[...],
        0.0,
    )

    # fc2 (no activation): (s_dim, hidden) @ (hidden, tn) -> (s_dim, tn)
    out_ref[...] = (
        jnp.dot(w2_ref[...], s3.astype(w2_ref.dtype),
                preferred_element_type=jnp.float32)
        + b2_ref[...]
    ).astype(out_ref.dtype)


def init_params(key, state_dim, action_dim, hidden=64, dtype=jnp.float32):
    """Deterministic parameter init mimicking nn.Linear shapes (out, in)."""
    ks = jax.random.split(key, 8)

    def lin(kw, kb, out_d, in_d):
        bound = 1.0 / jnp.sqrt(jnp.asarray(in_d, dtype))
        w = jax.random.uniform(kw, (out_d, in_d), dtype, -bound, bound)
        b = jax.random.uniform(kb, (out_d,), dtype, -bound, bound)
        return w, b

    ws1, bs1 = lin(ks[0], ks[1], hidden, state_dim)
    wa1, ba1 = lin(ks[2], ks[3], hidden, action_dim)
    w1, b1 = lin(ks[4], ks[5], hidden, 2 * hidden)
    w2, b2 = lin(ks[6], ks[7], state_dim, hidden)
    return dict(ws1=ws1, bs1=bs1, wa1=wa1, ba1=ba1, w1=w1, b1=b1, w2=w2, b2=b2)


def prepare_params(params, compute_dtype=jnp.float32):
    """One-time prep (outside the hot path):
      * Fuse fcs1/fca1 into a block-diagonal first-layer weight + stacked bias.
      * Reshape biases to (dim, 1) columns (kept in f32).
      * Cast weights to `compute_dtype` (f32 default; bf16 for v6e/v7x)."""
    hidden = params["ws1"].shape[0]
    s_dim = params["ws1"].shape[1]
    a_dim = params["wa1"].shape[1]
    out_dim = params["w2"].shape[0]

    win = jnp.zeros((2 * hidden, s_dim + a_dim), jnp.float32)
    win = win.at[:hidden, :s_dim].set(params["ws1"].astype(jnp.float32))
    win = win.at[hidden:, s_dim:].set(params["wa1"].astype(jnp.float32))
    bin_ = jnp.concatenate(
        [params["bs1"], params["ba1"]]).reshape(2 * hidden, 1)

    return dict(
        win=win.astype(compute_dtype),
        bin=bin_.astype(jnp.float32),
        w1=params["w1"].astype(compute_dtype),
        b1=params["b1"].reshape(hidden, 1).astype(jnp.float32),
        w2=params["w2"].astype(compute_dtype),
        b2=params["b2"].reshape(out_dim, 1).astype(jnp.float32),
        s_dim=s_dim,
        a_dim=a_dim,
        hidden=hidden,
    )


def _choose_tile_n(n, max_tile_n, min_grid_steps):
    """Pick a batch tile: full-n block when small (always legal), otherwise a
    lane-aligned (multiple of 128) tile capped at max_tile_n, and small enough
    to give >= min_grid_steps grid steps so v7x can use both TensorCores."""
    if n <= max_tile_n and (min_grid_steps <= 1 or n < 256 * min_grid_steps):
        return n
    target = -(-n // min_grid_steps)          # ceil(n / min_grid_steps)
    target = -(-target // 128) * 128          # round up to multiple of 128
    tile = max(128, min(max_tile_n, target))
    return n if tile >= n else tile


def predictor_forward(prepared, s, a, *, max_tile_n=4096, min_grid_steps=2):
    """s: (s_dim, n), a: (a_dim, n) -> out: (s_dim, n)."""
    s_dim, n = s.shape
    a_dim = a.shape[0]
    hidden = prepared["hidden"]
    in_dim = s_dim + a_dim
    compute_dtype = prepared["win"].dtype
    out_dtype = s.dtype

    # Single concatenated activation stream (one DMA per tile instead of two).
    sa = jnp.concatenate([s, a], axis=0).astype(compute_dtype)

    tile_n = _choose_tile_n(n, max_tile_n, min_grid_steps)
    grid = (pl.cdiv(n, tile_n),)

    def act_spec(d):
        return pl.BlockSpec((d, tile_n), lambda i: (0, i))

    def resident_spec(shape):
        # Weights/biases: same block every grid step -> stay resident in VMEM.
        return pl.BlockSpec(shape, lambda i: (0, 0))

    return pl.pallas_call(
        _predictor_kernel,
        out_shape=jax.ShapeDtypeStruct((s_dim, n), out_dtype),
        grid=grid,
        in_specs=[
            act_spec(in_dim),                      # sa = [s; a]
            resident_spec((2 * hidden, in_dim)),   # Win (block-diag)
            resident_spec((2 * hidden, 1)),        # bin
            resident_spec((hidden, 2 * hidden)),   # W1
            resident_spec((hidden, 1)),            # b1
            resident_spec((s_dim, hidden)),        # W2
            resident_spec((s_dim, 1)),             # b2
        ],
        out_specs=act_spec(s_dim),
        compiler_params=pltpu.CompilerParams(
            dimension_semantics=("parallel",),
        ),
    )(
        sa,
        prepared["win"], prepared["bin"],
        prepared["w1"], prepared["b1"],
        prepared["w2"], prepared["b2"],
    )


def predictor_reference(params, s, a):
    """Pure-JAX reference matching the PyTorch module exactly."""
    s_t, a_t = s.T, a.T
    s1 = jax.nn.relu(s_t @ params["ws1"].T + params["bs1"])
    a1 = jax.nn.relu(a_t @ params["wa1"].T + params["ba1"])
    s2 = jnp.concatenate([s1, a1], axis=1)
    s3 = jax.nn.relu(s2 @ params["w1"].T + params["b1"])
    out = s3 @ params["w2"].T + params["b2"]
    return out.T


# TODO(synk): state_matrix / input_matrix / linearise rely on torch autograd;
# they are host-side utilities on top of forward() and are not kernelized here.

if __name__ == "__main__":
    state_dim, action_dim, hidden, n = 4, 2, 64, 128

    key = jax.random.PRNGKey(0)
    k_params, k_s, k_a = jax.random.split(key, 3)

    params = init_params(k_params, state_dim, action_dim, hidden)
    prepared = prepare_params(params)  # f32 compute (keeps 1e-5 tolerance)

    s = jax.random.normal(k_s, (state_dim, n), jnp.float32)
    a = jax.random.normal(k_a, (action_dim, n), jnp.float32)

    out = jax.block_until_ready(predictor_forward(prepared, s, a))
    ref = jax.block_until_ready(predictor_reference(params, s, a))

    assert out.shape == (state_dim, n), out.shape
    assert jnp.allclose(out, ref, atol=1e-5, rtol=1e-5), "mismatch vs reference"
    print("KERNEL_OK")
</pallas_src>

<mosaic_0001>
module attributes {stable_mosaic.version = 11 : i64} {
  func.func @_predictor_kernel(%arg0: i32, %arg1: memref<6x128xf32, #tpu.memory_space<vmem>>, %arg2: memref<128x6xf32, #tpu.memory_space<vmem>>, %arg3: memref<128x1xf32, #tpu.memory_space<vmem>>, %arg4: memref<64x128xf32, #tpu.memory_space<vmem>>, %arg5: memref<64x1xf32, #tpu.memory_space<vmem>>, %arg6: memref<4x64xf32, #tpu.memory_space<vmem>>, %arg7: memref<4x1xf32, #tpu.memory_space<vmem>>, %arg8: memref<4x128xf32, #tpu.memory_space<vmem>>) attributes {dimension_semantics = [#tpu.dimension_semantics<parallel>], iteration_bounds = array<i64: 1>, scalar_prefetch = 0 : i64, scratch_operands = 0 : i64, tpu.core_type = #tpu.core_type<tc>, window_params = [{transform_indices = @transform_0, window_bounds = array<i64: 6, 128>}, {pipeline_mode = #tpu.pipeline_mode<synchronous>, transform_indices = @transform_1, window_bounds = array<i64: 128, 6>}, {pipeline_mode = #tpu.pipeline_mode<synchronous>, transform_indices = @transform_2, window_bounds = array<i64: 128, 1>}, {pipeline_mode = #tpu.pipeline_mode<synchronous>, transform_indices = @transform_3, window_bounds = array<i64: 64, 128>}, {pipeline_mode = #tpu.pipeline_mode<synchronous>, transform_indices = @transform_4, window_bounds = array<i64: 64, 1>}, {pipeline_mode = #tpu.pipeline_mode<synchronous>, transform_indices = @transform_5, window_bounds = array<i64: 4, 64>}, {pipeline_mode = #tpu.pipeline_mode<synchronous>, transform_indices = @transform_6, window_bounds = array<i64: 4, 1>}, {transform_indices = @transform_7, window_bounds = array<i64: 4, 128>}]} {
    %c0 = arith.constant 0 : index
    %c0_0 = arith.constant 0 : index
    %0 = vector.load %arg2[%c0, %c0_0] : memref<128x6xf32, #tpu.memory_space<vmem>>, vector<128x6xf32>
    %c0_1 = arith.constant 0 : index
    %c0_2 = arith.constant 0 : index
    %1 = vector.load %arg1[%c0_1, %c0_2] : memref<6x128xf32, #tpu.memory_space<vmem>>, vector<6x128xf32>
    %cst = arith.constant dense<0.000000e+00> : vector<128x128xf32>
    %2 = tpu.matmul %0, %1, %cst {dimension_numbers = #tpu.dot_dimension_numbers<[1], [0], [0], [1], [0, 0, 1, 1], [], []>} : vector<128x6xf32>, vector<6x128xf32>, vector<128x128xf32> -> vector<128x128xf32>
    %c0_3 = arith.constant 0 : index
    %c0_4 = arith.constant 0 : index
    %3 = vector.load %arg3[%c0_3, %c0_4] : memref<128x1xf32, #tpu.memory_space<vmem>>, vector<128x1xf32>
    %4 = vector.broadcast %3 : vector<128x1xf32> to vector<128x128xf32>
    %5 = arith.addf %2, %4 : vector<128x128xf32>
    %cst_5 = arith.constant 0.000000e+00 : f32
    %6 = vector.broadcast %cst_5 : f32 to vector<128x128xf32>
    %7 = arith.maximumf %5, %6 : vector<128x128xf32>
    %c0_6 = arith.constant 0 : index
    %c0_7 = arith.constant 0 : index
    %8 = vector.load %arg4[%c0_6, %c0_7] : memref<64x128xf32, #tpu.memory_space<vmem>>, vector<64x128xf32>
    %cst_8 = arith.constant dense<0.000000e+00> : vector<64x128xf32>
    %9 = tpu.matmul %8, %7, %cst_8 {dimension_numbers = #tpu.dot_dimension_numbers<[1], [0], [0], [1], [0, 0, 1, 1], [], []>} : vector<64x128xf32>, vector<128x128xf32>, vector<64x128xf32> -> vector<64x128xf32>
    %c0_9 = arith.constant 0 : index
    %c0_10 = arith.constant 0 : index
    %10 = vector.load %arg5[%c0_9, %c0_10] : memref<64x1xf32, #tpu.memory_space<vmem>>, vector<64x1xf32>
    %11 = vector.broadcast %10 : vector<64x1xf32> to vector<64x128xf32>
    %12 = arith.addf %9, %11 : vector<64x128xf32>
    %cst_11 = arith.constant 0.000000e+00 : f32
    %13 = vector.broadcast %cst_11 : f32 to vector<64x128xf32>
    %14 = arith.maximumf %12, %13 : vector<64x128xf32>
    %c0_12 = arith.constant 0 : index
    %c0_13 = arith.constant 0 : index
    %15 = vector.load %arg6[%c0_12, %c0_13] : memref<4x64xf32, #tpu.memory_space<vmem>>, vector<4x64xf32>
    %cst_14 = arith.constant dense<0.000000e+00> : vector<4x128xf32>
    %16 = tpu.matmul %15, %14, %cst_14 {dimension_numbers = #tpu.dot_dimension_numbers<[1], [0], [0], [1], [0, 0, 1, 1], [], []>} : vector<4x64xf32>, vector<64x128xf32>, vector<4x128xf32> -> vector<4x128xf32>
    %c0_15 = arith.constant 0 : index
    %c0_16 = arith.constant 0 : index
    %17 = vector.load %arg7[%c0_15, %c0_16] : memref<4x1xf32, #tpu.memory_space<vmem>>, vector<4x1xf32>
    %18 = vector.broadcast %17 : vector<4x1xf32> to vector<4x128xf32>
    %19 = arith.addf %16, %18 : vector<4x128xf32>
    %c0_17 = arith.constant 0 : index
    %c0_18 = arith.constant 0 : index
    %20 = vector.load %arg8[%c0_17, %c0_18] : memref<4x128xf32, #tpu.memory_space<vmem>>, vector<4x128xf32>
    tpu.vector_store %arg8[%c0_17, %c0_18], %19 {strides = array<i32>} : memref<4x128xf32, #tpu.memory_space<vmem>>, vector<4x128xf32>,
    return
  }
  func.func @transform_0(%arg0: i32) -> (i32, i32) {
    %c0_i32 = arith.constant 0 : i32
    %c0_i32_0 = arith.constant 0 : i32
    return %c0_i32, %arg0 : i32, i32
  }
  func.func @transform_1(%arg0: i32) -> (i32, i32) {
    %c0_i32 = arith.constant 0 : i32
    %c0_i32_0 = arith.constant 0 : i32
    %c0_i32_1 = arith.constant 0 : i32
    return %c0_i32, %c0_i32_0 : i32, i32
  }
  func.func @transform_2(%arg0: i32) -> (i32, i32) {
    %c0_i32 = arith.constant 0 : i32
    %c0_i32_0 = arith.constant 0 : i32
    %c0_i32_1 = arith.constant 0 : i32
    return %c0_i32, %c0_i32_0 : i32, i32
  }
  func.func @transform_3(%arg0: i32) -> (i32, i32) {
    %c0_i32 = arith.constant 0 : i32
    %c0_i32_0 = arith.constant 0 : i32
    %c0_i32_1 = arith.constant 0 : i32
    return %c0_i32, %c0_i32_0 : i32, i32
  }
  func.func @transform_4(%arg0: i32) -> (i32, i32) {
    %c0_i32 = arith.constant 0 : i32
    %c0_i32_0 = arith.constant 0 : i32
    %c0_i32_1 = arith.constant 0 : i32
    return %c0_i32, %c0_i32_0 : i32, i32
  }
  func.func @transform_5(%arg0: i32) -> (i32, i32) {
    %c0_i32 = arith.constant 0 : i32
    %c0_i32_0 = arith.constant 0 : i32
    %c0_i32_1 = arith.constant 0 : i32
    return %c0_i32, %c0_i32_0 : i32, i32
  }
  func.func @transform_6(%arg0: i32) -> (i32, i32) {
    %c0_i32 = arith.constant 0 : i32
    %c0_i32_0 = arith.constant 0 : i32
    %c0_i32_1 = arith.constant 0 : i32
    return %c0_i32, %c0_i32_0 : i32, i32
  }
  func.func @transform_7(%arg0: i32) -> (i32, i32) {
    %c0_i32 = arith.constant 0 : i32
    %c0_i32_0 = arith.constant 0 : i32
    return %c0_i32, %arg0 : i32, i32
  }
}

</mosaic_0001>

<llo_original>
// kernel: tpu_custom_call.1
$region0: #{tpu_custom_call.1}
  #allocation0 [shape = 'u32[]', space=smem, size = 0x4, offset = 0x4, fixed_abs, tag = 'smem constant byte address 0x4 - core index']
  #allocation1 [shape = 'u32[144,128]{1,0:T(1,128)}', space=vmem, size = 0x12000, scoped, tag = 'internal scratch']
  %s0 = inlined_call_operand.vmem [shape: f32[6,128], index: 0, kind: input, shape index: {}]
  %s1 = inlined_call_operand.vmem [shape: f32[128,6], index: 1, kind: input, shape index: {}]
  %s2 = inlined_call_operand.vmem [shape: f32[128,1], index: 2, kind: input, shape index: {}]
  %s3 = inlined_call_operand.vmem [shape: f32[64,128], index: 3, kind: input, shape index: {}]
  %s4 = inlined_call_operand.vmem [shape: f32[64,1], index: 4, kind: input, shape index: {}]
  %s5 = inlined_call_operand.vmem [shape: f32[4,64], index: 5, kind: input, shape index: {}]
  %s6 = inlined_call_operand.vmem [shape: f32[4,1], index: 6, kind: input, shape index: {}]
  %s7 = inlined_call_operand.hbm [shape: f32[4,128], index: 7, kind: output, shape index: {}]
  %s8 = sld [smem:[#allocation0]]
  $region38: #{tpu_custom_call.1} parent=0
    _
  %s10 = ssub.s32 1, %s8
  %s11 = scalar_select 0, %s10, %s8
  $region1: #{tpu_custom_call.1} parent=0
    #allocation2 [shape = 'u8[2048]{0}', space=vmem, size = 0x800, scoped, tag = 'output window, operand 0, single buffered']
    #allocation3 [shape = 's32[1]{0}', space=sflag, size = 0x4, scoped, tag = 'scoped memory for tpu_custom_call.1']
    %12 = vsyncpa [#allocation3], 0
    // Predicated region
    $region2: #{tpu_custom_call.1} parent=1 // pred_check
      _
    $region3: #{tpu_custom_call.1} parent=1 // pred_check_branch
      %14 = sbr.rel (0) target = $region5
    $region4: #{tpu_custom_call.1} parent=1 // pred_region
      _
    $region5: #{tpu_custom_call.1} parent=1 // pred_fallthru
      _
    // Predicated region
    $region6: #{tpu_custom_call.1} parent=1 // pred_check
      _
    $region7: #{tpu_custom_call.1} parent=1 // pred_check_branch
      %16 = sbr.rel (0) target = $region9
    $region8: #{tpu_custom_call.1} parent=1 // pred_region
      _
    $region9: #{tpu_custom_call.1} parent=1 // pred_fallthru
      _
    // Predicated region
    $region10: #{tpu_custom_call.1} parent=1 // pred_check
      _
    $region11: #{tpu_custom_call.1} parent=1 // pred_check_branch
      %18 = sbr.rel (0) target = $region13
    $region12: #{tpu_custom_call.1} parent=1 // pred_region
      _
    $region13: #{tpu_custom_call.1} parent=1 // pred_fallthru
      _
    // Predicated region
    $region14: #{tpu_custom_call.1} parent=1 // pred_check
      _
    $region15: #{tpu_custom_call.1} parent=1 // pred_check_branch
      %20 = sbr.rel (0) target = $region17
    $region16: #{tpu_custom_call.1} parent=1 // pred_region
      _
    $region17: #{tpu_custom_call.1} parent=1 // pred_fallthru
      _
    // Predicated region
    $region18: #{tpu_custom_call.1} parent=1 // pred_check
      _
    $region19: #{tpu_custom_call.1} parent=1 // pred_check_branch
      %22 = sbr.rel (0) target = $region21
    $region20: #{tpu_custom_call.1} parent=1 // pred_region
      _
    $region21: #{tpu_custom_call.1} parent=1 // pred_fallthru
      _
    // Predicated region
    $region22: #{tpu_custom_call.1} parent=1 // pred_check
      _
    $region23: #{tpu_custom_call.1} parent=1 // pred_check_branch
      %24 = sbr.rel (0) target = $region25
    $region24: #{tpu_custom_call.1} parent=1 // pred_region
      _
    $region25: #{tpu_custom_call.1} parent=1 // pred_fallthru
      _
    // Predicated region
    $region26: #{tpu_custom_call.1} parent=1 // pred_check
      _
    $region27: #{tpu_custom_call.1} parent=1 // pred_check_branch
      %26 = sbr.rel (0) target = $region29
    $region28: #{tpu_custom_call.1} parent=1 // pred_region
      _
    $region29: #{tpu_custom_call.1} parent=1 // pred_fallthru
      _
    %v27 = vld [vmem:[%s1] sm:$0xff]
    %v28 = vld [vmem:[%s1 + $0x8] sm:$0xff]
    %v29 = vld [vmem:[%s1 + $0x10] sm:$0xff]
    %v30 = vld [vmem:[%s1 + $0x18] sm:$0xff]
    %v31 = vld [vmem:[%s1 + $0x20] sm:$0xff]
    %v32 = vld [vmem:[%s1 + $0x28] sm:$0xff]
    %v33 = vld [vmem:[%s1 + $0x30] sm:$0xff]
    %v34 = vld [vmem:[%s1 + $0x38] sm:$0xff]
    %v35 = vld [vmem:[%s1 + $0x40] sm:$0xff]
    %v36 = vld [vmem:[%s1 + $0x48] sm:$0xff]
    %v37 = vld [vmem:[%s1 + $0x50] sm:$0xff]
    %v38 = vld [vmem:[%s1 + $0x58] sm:$0xff]
    %v39 = vld [vmem:[%s1 + $0x60] sm:$0xff]
    %v40 = vld [vmem:[%s1 + $0x68] sm:$0xff]
    %v41 = vld [vmem:[%s1 + $0x70] sm:$0xff]
    %v42 = vld [vmem:[%s1 + $0x78] sm:$0xff]
    %v43 = vld [vmem:[%s0] sm:$0x3f]
    %v44 = vld [vmem:[%s2] sm:$0xff]
    %v45 = vld [vmem:[%s2 + $0x8] sm:$0xff]
    %v46 = vld [vmem:[%s2 + $0x10] sm:$0xff]
    %v47 = vld [vmem:[%s2 + $0x18] sm:$0xff]
    %v48 = vld [vmem:[%s2 + $0x20] sm:$0xff]
    %v49 = vld [vmem:[%s2 + $0x28] sm:$0xff]
    %v50 = vld [vmem:[%s2 + $0x30] sm:$0xff]
    %v51 = vld [vmem:[%s2 + $0x38] sm:$0xff]
    %v52 = vld [vmem:[%s2 + $0x40] sm:$0xff]
    %v53 = vld [vmem:[%s2 + $0x48] sm:$0xff]
    %v54 = vld [vmem:[%s2 + $0x50] sm:$0xff]
    %v55 = vld [vmem:[%s2 + $0x58] sm:$0xff]
    %v56 = vld [vmem:[%s2 + $0x60] sm:$0xff]
    %v57 = vld [vmem:[%s2 + $0x68] sm:$0xff]
    %v58 = vld [vmem:[%s2 + $0x70] sm:$0xff]
    %v59 = vld [vmem:[%s2 + $0x78] sm:$0xff]
    %61 = vset.pattern.permute.xlu0 0
    %62 = vperm.xlu0 %61, %v44
    %v63 = vpop.permute.xlu0 %62
    %66 = vset.pattern.permute.xlu0 0
    %67 = vperm.xlu0 %66, %v45
    %v68 = vpop.permute.xlu0 %67
    %71 = vset.pattern.permute.xlu0 0
    %72 = vperm.xlu0 %71, %v46
    %v73 = vpop.permute.xlu0 %72
    %76 = vset.pattern.permute.xlu0 0
    %77 = vperm.xlu0 %76, %v47
    %v78 = vpop.permute.xlu0 %77
    %81 = vset.pattern.permute.xlu0 0
    %82 = vperm.xlu0 %81, %v48
    %v83 = vpop.permute.xlu0 %82
    %86 = vset.pattern.permute.xlu0 0
    %87 = vperm.xlu0 %86, %v49
    %v88 = vpop.permute.xlu0 %87
    %91 = vset.pattern.permute.xlu0 0
    %92 = vperm.xlu0 %91, %v50
    %v93 = vpop.permute.xlu0 %92
    %96 = vset.pattern.permute.xlu0 0
    %97 = vperm.xlu0 %96, %v51
    %v98 = vpop.permute.xlu0 %97
    %101 = vset.pattern.permute.xlu0 0
    %102 = vperm.xlu0 %101, %v52
    %v103 = vpop.permute.xlu0 %102
    %106 = vset.pattern.permute.xlu0 0
    %107 = vperm.xlu0 %106, %v53
    %v108 = vpop.permute.xlu0 %107
    %111 = vset.pattern.permute.xlu0 0
    %112 = vperm.xlu0 %111, %v54
    %v113 = vpop.permute.xlu0 %112
    %116 = vset.pattern.permute.xlu0 0
    %117 = vperm.xlu0 %116, %v55
    %v118 = vpop.permute.xlu0 %117
    %121 = vset.pattern.permute.xlu0 0
    %122 = vperm.xlu0 %121, %v56
    %v123 = vpop.permute.xlu0 %122
    %126 = vset.pattern.permute.xlu0 0
    %127 = vperm.xlu0 %126, %v57
    %v128 = vpop.permute.xlu0 %127
    %131 = vset.pattern.permute.xlu0 0
    %132 = vperm.xlu0 %131, %v58
    %v133 = vpop.permute.xlu0 %132
    %136 = vset.pattern.permute.xlu0 0
    %137 = vperm.xlu0 %136, %v59
    %v138 = vpop.permute.xlu0 %137
    %vm140 = vcmask 48128
    %v142 = vsel %vm140, %v27, 0
    %v145 = vsel %vm140, %v28, 0
    %v148 = vsel %vm140, %v29, 0
    %v151 = vsel %vm140, %v30, 0
    %v154 = vsel %vm140, %v31, 0
    %v157 = vsel %vm140, %v32, 0
    %v160 = vsel %vm140, %v33, 0
    %v163 = vsel %vm140, %v34, 0
    %v166 = vsel %vm140, %v35, 0
    %v169 = vsel %vm140, %v36, 0
    %v172 = vsel %vm140, %v37, 0
    %v175 = vsel %vm140, %v38, 0
    %v178 = vsel %vm140, %v39, 0
    %v181 = vsel %vm140, %v40, 0
    %v184 = vsel %vm140, %v41, 0
    %v187 = vsel %vm140, %v42, 0
    %vm189 = vcmask 1045504
    %v191 = vsel %vm189, %v43, 0
    %193 = vmatprep.subr.mxu0 0.0
    %194 = vmatpush1.msra.mxu0 %v191
    %195 = vmatprep.subr.mxu0 0.0
    %196 = vmatpush1.msra.mxu0 0.0
    %197 = vmatprep.subr.mxu0 0.0
    %198 = vmatpush1.msra.mxu0 0.0
    %199 = vmatprep.subr.mxu0 0.0
    %200 = vmatpush1.msra.mxu0 0.0
    %201 = vmatprep.subr.mxu0 0.0
    %202 = vmatpush1.msra.mxu0 0.0
    %203 = vmatprep.subr.mxu0 0.0
    %204 = vmatpush1.msra.mxu0 0.0
    %205 = vmatprep.subr.mxu0 0.0
    %206 = vmatpush1.msra.mxu0 0.0
    %207 = vmatprep.subr.mxu0 0.0
    %208 = vmatpush1.msra.mxu0 0.0
    %209 = vmatprep.subr.mxu0 0.0
    %210 = vmatpush1.msra.mxu0 0.0
    %211 = vmatprep.subr.mxu0 0.0
    %212 = vmatpush1.msra.mxu0 0.0
    %213 = vmatprep.subr.mxu0 0.0
    %214 = vmatpush1.msra.mxu0 0.0
    %215 = vmatprep.subr.mxu0 0.0
    %216 = vmatpush1.msra.mxu0 0.0
    %217 = vmatprep.subr.mxu0 0.0
    %218 = vmatpush1.msra.mxu0 0.0
    %219 = vmatprep.subr.mxu0 0.0
    %220 = vmatpush1.msra.mxu0 0.0
    %221 = vmatprep.subr.mxu0 0.0
    %222 = vmatpush1.msra.mxu0 0.0
    %223 = vmatprep.subr.mxu0 0.0
    %224 = vmatpush1.msra.mxu0 0.0
    %225 = vmatprep.subr.mxu0 0.0
    %226 = vmatpush1.msra.mxu0 0.0
    %227 = vmatprep.subr.mxu0 0.0
    %228 = vmatpush1.msra.mxu0 0.0
    %229 = vmatprep.subr.mxu0 0.0
    %230 = vmatpush1.msra.mxu0 0.0
    %231 = vmatprep.subr.mxu0 0.0
    %232 = vmatpush1.msra.mxu0 0.0
    %233 = vmatprep.subr.mxu0 0.0
    %234 = vmatpush1.msra.mxu0 0.0
    %235 = vmatprep.subr.mxu0 0.0
    %236 = vmatpush1.msra.mxu0 0.0
    %237 = vmatprep.subr.mxu0 0.0
    %238 = vmatpush1.msra.mxu0 0.0
    %239 = vmatprep.subr.mxu0 0.0
    %240 = vmatpush1.msra.mxu0 0.0
    %241 = vmatprep.subr.mxu0 0.0
    %242 = vmatpush1.msra.mxu0 0.0
    %243 = vmatprep.subr.mxu0 0.0
    %244 = vmatpush1.msra.mxu0 0.0
    %245 = vmatprep.subr.mxu0 0.0
    %246 = vmatpush1.msra.mxu0 0.0
    %247 = vmatprep.subr.mxu0 0.0
    %248 = vmatpush1.msra.mxu0 0.0
    %249 = vmatprep.subr.mxu0 0.0
    %250 = vmatpush1.msra.mxu0 0.0
    %251 = vmatprep.subr.mxu0 0.0
    %252 = vmatpush1.msra.mxu0 0.0
    %253 = vmatprep.subr.mxu0 0.0
    %254 = vmatpush1.msra.mxu0 0.0
    %255 = vmatprep.subr.mxu0 0.0
    %256 = vmatpush1.msra.mxu0 0.0
    %257 = vmatprep.mubr.f32.mxu0 0.0
    %258 = vmatmul.mubr.f32.gmra.mrb[0].mxu0 %v142
    %v259 = vpop.f32.mrb[0].mxu0
    %v260 = vadd.f32 %v63, %v259
    %v261 = vpop.f32.mrb[0].mxu0
    %262 = vmatprep.mubr.f32.mxu0 0.0
    %263 = vmatmul.mubr.f32.gmra.mrb[0].mxu0 %v145
    %v264 = vpop.f32.mrb[0].mxu0
    %v265 = vadd.f32 %v68, %v264
    %v266 = vpop.f32.mrb[0].mxu0
    %267 = vmatprep.mubr.f32.mxu0 0.0
    %268 = vmatmul.mubr.f32.gmra.mrb[0].mxu0 %v148
    %v269 = vpop.f32.mrb[0].mxu0
    %v270 = vadd.f32 %v73, %v269
    %v271 = vpop.f32.mrb[0].mxu0
    %272 = vmatprep.mubr.f32.mxu0 0.0
    %273 = vmatmul.mubr.f32.gmra.mrb[0].mxu0 %v151
    %v274 = vpop.f32.mrb[0].mxu0
    %v275 = vadd.f32 %v78, %v274
    %v276 = vpop.f32.mrb[0].mxu0
    %277 = vmatprep.mubr.f32.mxu0 0.0
    %278 = vmatmul.mubr.f32.gmra.mrb[0].mxu0 %v154
    %v279 = vpop.f32.mrb[0].mxu0
    %v280 = vadd.f32 %v83, %v279
    %v281 = vpop.f32.mrb[0].mxu0
    %282 = vmatprep.mubr.f32.mxu0 0.0
    %283 = vmatmul.mubr.f32.gmra.mrb[0].mxu0 %v157
    %v284 = vpop.f32.mrb[0].mxu0
    %v285 = vadd.f32 %v88, %v284
    %v286 = vpop.f32.mrb[0].mxu0
    %287 = vmatprep.mubr.f32.mxu0 0.0
    %288 = vmatmul.mubr.f32.gmra.mrb[0].mxu0 %v160
    %v289 = vpop.f32.mrb[0].mxu0
    %v290 = vadd.f32 %v93, %v289
    %v291 = vpop.f32.mrb[0].mxu0
    %292 = vmatprep.mubr.f32.mxu0 0.0
    %293 = vmatmul.mubr.f32.gmra.mrb[0].mxu0 %v163
    %v294 = vpop.f32.mrb[0].mxu0
    %v295 = vadd.f32 %v98, %v294
    %v296 = vpop.f32.mrb[0].mxu0
    %297 = vmatprep.mubr.f32.mxu0 0.0
    %298 = vmatmul.mubr.f32.gmra.mrb[0].mxu0 %v166
    %v299 = vpop.f32.mrb[0].mxu0
    %v300 = vadd.f32 %v103, %v299
    %v301 = vpop.f32.mrb[0].mxu0
    %302 = vmatprep.mubr.f32.mxu0 0.0
    %303 = vmatmul.mubr.f32.gmra.mrb[0].mxu0 %v169
    %v304 = vpop.f32.mrb[0].mxu0
    %v305 = vadd.f32 %v108, %v304
    %v306 = vpop.f32.mrb[0].mxu0
    %307 = vmatprep.mubr.f32.mxu0 0.0
    %308 = vmatmul.mubr.f32.gmra.mrb[0].mxu0 %v172
    %v309 = vpop.f32.mrb[0].mxu0
    %v310 = vadd.f32 %v113, %v309
    %v311 = vpop.f32.mrb[0].mxu0
    %312 = vmatprep.mubr.f32.mxu0 0.0
    %313 = vmatmul.mubr.f32.gmra.mrb[0].mxu0 %v175
    %v314 = vpop.f32.mrb[0].mxu0
    %v315 = vadd.f32 %v118, %v314
    %v316 = vpop.f32.mrb[0].mxu0
    %317 = vmatprep.mubr.f32.mxu0 0.0
    %318 = vmatmul.mubr.f32.gmra.mrb[0].mxu0 %v178
    %v319 = vpop.f32.mrb[0].mxu0
    %v320 = vadd.f32 %v123, %v319
    %v321 = vpop.f32.mrb[0].mxu0
    %322 = vmatprep.mubr.f32.mxu0 0.0
    %323 = vmatmul.mubr.f32.gmra.mrb[0].mxu0 %v181
    %v324 = vpop.f32.mrb[0].mxu0
    %v325 = vadd.f32 %v128, %v324
    %v326 = vpop.f32.mrb[0].mxu0
    %327 = vmatprep.mubr.f32.mxu0 0.0
    %328 = vmatmul.mubr.f32.gmra.mrb[0].mxu0 %v184
    %v329 = vpop.f32.mrb[0].mxu0
    %v330 = vadd.f32 %v133, %v329
    %v331 = vpop.f32.mrb[0].mxu0
    %332 = vmatprep.mubr.f32.mxu0 0.0
    %333 = vmatmul.mubr.f32.gmra.mrb[0].mxu0 %v187
    %v334 = vpop.f32.mrb[0].mxu0
    %v335 = vadd.f32 %v138, %v334
    %v336 = vpop.f32.mrb[0].mxu0
    %337 = vdwg.mxu0
    %v338 = vmax.f32 %v260, 0.0
    %v339 = vmax.f32 %v265, 0.0
    %v340 = vmax.f32 %v270, 0.0
    %v341 = vmax.f32 %v275, 0.0
    %v342 = vmax.f32 %v280, 0.0
    %v343 = vmax.f32 %v285, 0.0
    %v344 = vmax.f32 %v290, 0.0
    %v345 = vmax.f32 %v295, 0.0
    %v346 = vmax.f32 %v300, 0.0
    %v347 = vmax.f32 %v305, 0.0
    %v348 = vmax.f32 %v310, 0.0
    %v349 = vmax.f32 %v315, 0.0
    %v350 = vmax.f32 %v320, 0.0
    %v351 = vmax.f32 %v325, 0.0
    %v352 = vmax.f32 %v330, 0.0
    %v353 = vmax.f32 %v335, 0.0
    %v354 = vld [vmem:[%s3] sm:$0xff]
    %v355 = vld [vmem:[%s3 + $0x8] sm:$0xff]
    %v356 = vld [vmem:[%s3 + $0x10] sm:$0xff]
    %v357 = vld [vmem:[%s3 + $0x18] sm:$0xff]
    %v358 = vld [vmem:[%s3 + $0x20] sm:$0xff]
    %v359 = vld [vmem:[%s3 + $0x28] sm:$0xff]
    %v360 = vld [vmem:[%s3 + $0x30] sm:$0xff]
    %v361 = vld [vmem:[%s3 + $0x38] sm:$0xff]
    %v362 = vld [vmem:[%s4] sm:$0xff]
    %v363 = vld [vmem:[%s4 + $0x8] sm:$0xff]
    %v364 = vld [vmem:[%s4 + $0x10] sm:$0xff]
    %v365 = vld [vmem:[%s4 + $0x18] sm:$0xff]
    %v366 = vld [vmem:[%s4 + $0x20] sm:$0xff]
    %v367 = vld [vmem:[%s4 + $0x28] sm:$0xff]
    %v368 = vld [vmem:[%s4 + $0x30] sm:$0xff]
    %v369 = vld [vmem:[%s4 + $0x38] sm:$0xff]
    %371 = vset.pattern.permute.xlu0 0
    %372 = vperm.xlu0 %371, %v362
    %v373 = vpop.permute.xlu0 %372
    %376 = vset.pattern.permute.xlu0 0
    %377 = vperm.xlu0 %376, %v363
    %v378 = vpop.permute.xlu0 %377
    %381 = vset.pattern.permute.xlu0 0
    %382 = vperm.xlu0 %381, %v364
    %v383 = vpop.permute.xlu0 %382
    %386 = vset.pattern.permute.xlu0 0
    %387 = vperm.xlu0 %386, %v365
    %v388 = vpop.permute.xlu0 %387
    %391 = vset.pattern.permute.xlu0 0
    %392 = vperm.xlu0 %391, %v366
    %v393 = vpop.permute.xlu0 %392
    %396 = vset.pattern.permute.xlu0 0
    %397 = vperm.xlu0 %396, %v367
    %v398 = vpop.permute.xlu0 %397
    %401 = vset.pattern.permute.xlu0 0
    %402 = vperm.xlu0 %401, %v368
    %v403 = vpop.permute.xlu0 %402
    %406 = vset.pattern.permute.xlu0 0
    %407 = vperm.xlu0 %406, %v369
    %v408 = vpop.permute.xlu0 %407
    %410 = vmatprep.subr.mxu0 0.0
    %411 = vmatpush1.msra.mxu0 %v338
    %412 = vmatprep.subr.mxu0 0.0
    %413 = vmatpush1.msra.mxu0 %v339
    %414 = vmatprep.subr.mxu0 0.0
    %415 = vmatpush1.msra.mxu0 %v340
    %416 = vmatprep.subr.mxu0 0.0
    %417 = vmatpush1.msra.mxu0 %v341
    %418 = vmatprep.subr.mxu0 0.0
    %419 = vmatpush1.msra.mxu0 %v342
    %420 = vmatprep.subr.mxu0 0.0
    %421 = vmatpush1.msra.mxu0 %v343
    %422 = vmatprep.subr.mxu0 0.0
    %423 = vmatpush1.msra.mxu0 %v344
    %424 = vmatprep.subr.mxu0 0.0
    %425 = vmatpush1.msra.mxu0 %v345
    %426 = vmatprep.subr.mxu0 0.0
    %427 = vmatpush1.msra.mxu0 %v346
    %428 = vmatprep.subr.mxu0 0.0
    %429 = vmatpush1.msra.mxu0 %v347
    %430 = vmatprep.subr.mxu0 0.0
    %431 = vmatpush1.msra.mxu0 %v348
    %432 = vmatprep.subr.mxu0 0.0
    %433 = vmatpush1.msra.mxu0 %v349
    %434 = vmatprep.subr.mxu0 0.0
    %435 = vmatpush1.msra.mxu0 %v350
    %436 = vmatprep.subr.mxu0 0.0
    %437 = vmatpush1.msra.mxu0 %v351
    %438 = vmatprep.subr.mxu0 0.0
    %439 = vmatpush1.msra.mxu0 %v352
    %440 = vmatprep.subr.mxu0 0.0
    %441 = vmatpush1.msra.mxu0 %v353
    %442 = vmatprep.subr.mxu0 0.0
    %443 = vmatpush1.msra.mxu0 0.0
    %444 = vmatprep.subr.mxu0 0.0
    %445 = vmatpush1.msra.mxu0 0.0
    %446 = vmatprep.subr.mxu0 0.0
    %447 = vmatpush1.msra.mxu0 0.0
    %448 = vmatprep.subr.mxu0 0.0
    %449 = vmatpush1.msra.mxu0 0.0
    %450 = vmatprep.subr.mxu0 0.0
    %451 = vmatpush1.msra.mxu0 0.0
    %452 = vmatprep.subr.mxu0 0.0
    %453 = vmatpush1.msra.mxu0 0.0
    %454 = vmatprep.subr.mxu0 0.0
    %455 = vmatpush1.msra.mxu0 0.0
    %456 = vmatprep.subr.mxu0 0.0
    %457 = vmatpush1.msra.mxu0 0.0
    %458 = vmatprep.subr.mxu0 0.0
    %459 = vmatpush1.msra.mxu0 0.0
    %460 = vmatprep.subr.mxu0 0.0
    %461 = vmatpush1.msra.mxu0 0.0
    %462 = vmatprep.subr.mxu0 0.0
    %463 = vmatpush1.msra.mxu0 0.0
    %464 = vmatprep.subr.mxu0 0.0
    %465 = vmatpush1.msra.mxu0 0.0
    %466 = vmatprep.subr.mxu0 0.0
    %467 = vmatpush1.msra.mxu0 0.0
    %468 = vmatprep.subr.mxu0 0.0
    %469 = vmatpush1.msra.mxu0 0.0
    %470 = vmatprep.subr.mxu0 0.0
    %471 = vmatpush1.msra.mxu0 0.0
    %472 = vmatprep.subr.mxu0 0.0
    %473 = vmatpush1.msra.mxu0 0.0
    %474 = vmatprep.mubr.f32.mxu0 0.0
    %475 = vmatmul.mubr.f32.gmra.mrb[0].mxu0 %v354
    %v476 = vpop.f32.mrb[0].mxu0
    %v477 = vadd.f32 %v373, %v476
    %v478 = vpop.f32.mrb[0].mxu0
    %479 = vmatprep.mubr.f32.mxu0 0.0
    %480 = vmatmul.mubr.f32.gmra.mrb[0].mxu0 %v355
    %v481 = vpop.f32.mrb[0].mxu0
    %v482 = vadd.f32 %v378, %v481
    %v483 = vpop.f32.mrb[0].mxu0
    %484 = vmatprep.mubr.f32.mxu0 0.0
    %485 = vmatmul.mubr.f32.gmra.mrb[0].mxu0 %v356
    %v486 = vpop.f32.mrb[0].mxu0
    %v487 = vadd.f32 %v383, %v486
    %v488 = vpop.f32.mrb[0].mxu0
    %489 = vmatprep.mubr.f32.mxu0 0.0
    %490 = vmatmul.mubr.f32.gmra.mrb[0].mxu0 %v357
    %v491 = vpop.f32.mrb[0].mxu0
    %v492 = vadd.f32 %v388, %v491
    %v493 = vpop.f32.mrb[0].mxu0
    %494 = vmatprep.mubr.f32.mxu0 0.0
    %495 = vmatmul.mubr.f32.gmra.mrb[0].mxu0 %v358
    %v496 = vpop.f32.mrb[0].mxu0
    %v497 = vadd.f32 %v393, %v496
    %v498 = vpop.f32.mrb[0].mxu0
    %499 = vmatprep.mubr.f32.mxu0 0.0
    %500 = vmatmul.mubr.f32.gmra.mrb[0].mxu0 %v359
    %v501 = vpop.f32.mrb[0].mxu0
    %v502 = vadd.f32 %v398, %v501
    %v503 = vpop.f32.mrb[0].mxu0
    %504 = vmatprep.mubr.f32.mxu0 0.0
    %505 = vmatmul.mubr.f32.gmra.mrb[0].mxu0 %v360
    %v506 = vpop.f32.mrb[0].mxu0
    %v507 = vadd.f32 %v403, %v506
    %v508 = vpop.f32.mrb[0].mxu0
    %509 = vmatprep.mubr.f32.mxu0 0.0
    %510 = vmatmul.mubr.f32.gmra.mrb[0].mxu0 %v361
    %v511 = vpop.f32.mrb[0].mxu0
    %v512 = vadd.f32 %v408, %v511
    %v513 = vpop.f32.mrb[0].mxu0
    %514 = vdwg.mxu0
    %v515 = vmax.f32 %v477, 0.0
    %v516 = vmax.f32 %v482, 0.0
    %v517 = vmax.f32 %v487, 0.0
    %v518 = vmax.f32 %v492, 0.0
    %v519 = vmax.f32 %v497, 0.0
    %v520 = vmax.f32 %v502, 0.0
    %v521 = vmax.f32 %v507, 0.0
    %v522 = vmax.f32 %v512, 0.0
    %v523 = vld [vmem:[%s5] sm:$0xf]
    %v524 = vld [vmem:[%s6] sm:$0xf]
    %526 = vset.pattern.permute.xlu0 0
    %527 = vperm.xlu0 %526, %v524
    %v528 = vpop.permute.xlu0 %527
    %vm530 = vcmask 523264
    %v532 = vsel %vm530, %v523, 0
    %534 = vmatprep.subr.mxu0 0.0
    %535 = vmatpush1.msra.mxu0 %v515
    %536 = vmatprep.subr.mxu0 0.0
    %537 = vmatpush1.msra.mxu0 %v516
    %538 = vmatprep.subr.mxu0 0.0
    %539 = vmatpush1.msra.mxu0 %v517
    %540 = vmatprep.subr.mxu0 0.0
    %541 = vmatpush1.msra.mxu0 %v518
    %542 = vmatprep.subr.mxu0 0.0
    %543 = vmatpush1.msra.mxu0 %v519
    %544 = vmatprep.subr.mxu0 0.0
    %545 = vmatpush1.msra.mxu0 %v520
    %546 = vmatprep.subr.mxu0 0.0
    %547 = vmatpush1.msra.mxu0 %v521
    %548 = vmatprep.subr.mxu0 0.0
    %549 = vmatpush1.msra.mxu0 %v522
    %550 = vmatprep.subr.mxu0 0.0
    %551 = vmatpush1.msra.mxu0 0.0
    %552 = vmatprep.subr.mxu0 0.0
    %553 = vmatpush1.msra.mxu0 0.0
    %554 = vmatprep.subr.mxu0 0.0
    %555 = vmatpush1.msra.mxu0 0.0
    %556 = vmatprep.subr.mxu0 0.0
    %557 = vmatpush1.msra.mxu0 0.0
    %558 = vmatprep.subr.mxu0 0.0
    %559 = vmatpush1.msra.mxu0 0.0
    %560 = vmatprep.subr.mxu0 0.0
    %561 = vmatpush1.msra.mxu0 0.0
    %562 = vmatprep.subr.mxu0 0.0
    %563 = vmatpush1.msra.mxu0 0.0
    %564 = vmatprep.subr.mxu0 0.0
    %565 = vmatpush1.msra.mxu0 0.0
    %566 = vmatprep.subr.mxu0 0.0
    %567 = vmatpush1.msra.mxu0 0.0
    %568 = vmatprep.subr.mxu0 0.0
    %569 = vmatpush1.msra.mxu0 0.0
    %570 = vmatprep.subr.mxu0 0.0
    %571 = vmatpush1.msra.mxu0 0.0
    %572 = vmatprep.subr.mxu0 0.0
    %573 = vmatpush1.msra.mxu0 0.0
    %574 = vmatprep.subr.mxu0 0.0
    %575 = vmatpush1.msra.mxu0 0.0
    %576 = vmatprep.subr.mxu0 0.0
    %577 = vmatpush1.msra.mxu0 0.0
    %578 = vmatprep.subr.mxu0 0.0
    %579 = vmatpush1.msra.mxu0 0.0
    %580 = vmatprep.subr.mxu0 0.0
    %581 = vmatpush1.msra.mxu0 0.0
    %582 = vmatprep.subr.mxu0 0.0
    %583 = vmatpush1.msra.mxu0 0.0
    %584 = vmatprep.subr.mxu0 0.0
    %585 = vmatpush1.msra.mxu0 0.0
    %586 = vmatprep.subr.mxu0 0.0
    %587 = vmatpush1.msra.mxu0 0.0
    %588 = vmatprep.subr.mxu0 0.0
    %589 = vmatpush1.msra.mxu0 0.0
    %590 = vmatprep.subr.mxu0 0.0
    %591 = vmatpush1.msra.mxu0 0.0
    %592 = vmatprep.subr.mxu0 0.0
    %593 = vmatpush1.msra.mxu0 0.0
    %594 = vmatprep.subr.mxu0 0.0
    %595 = vmatpush1.msra.mxu0 0.0
    %596 = vmatprep.subr.mxu0 0.0
    %597 = vmatpush1.msra.mxu0 0.0
    %598 = vmatprep.mubr.f32.mxu0 0.0
    %599 = vmatmul.mubr.f32.gmra.mrb[0].mxu0 %v532
    %v600 = vpop.f32.mrb[0].mxu0
    %v601 = vadd.f32 %v528, %v600
    %v602 = vpop.f32.mrb[0].mxu0
    %603 = vdwg.mxu0
    %604 = vst [vmem:[#allocation2] sm:$0xf] %v601
    // Predicated region
    $region30: #{tpu_custom_call.1} parent=1 // pred_check
      _
    $region31: #{tpu_custom_call.1} parent=1 // pred_check_branch
      %606 = sbr.rel (0) target = $region33
    $region32: #{tpu_custom_call.1} parent=1 // pred_region
      %s608 = ssub.s32 64, 64
      %609 = vsyncadd [#allocation3], %s608
      %s611 = sshll.u32 [#allocation2], 4
      %s612 = int_to_ptr.vmem [resolvable:$true] %s611
      %614 = dma.vmem_to_hbm [thread:$0]  %s612, 64, %s7, [#allocation3]
    $region33: #{tpu_custom_call.1} parent=1 // pred_fallthru
      _
    // Predicated region
    $region34: #{tpu_custom_call.1} parent=1 // pred_check
      _
    $region35: #{tpu_custom_call.1} parent=1 // pred_check_branch
      %616 = sbr.rel (0) target = $region37
    $region36: #{tpu_custom_call.1} parent=1 // pred_region
      %617 = dma.done [#allocation3], 64
    $region37: #{tpu_custom_call.1} parent=1 // pred_fallthru
      _
    %618 = vsyncpa [#allocation3], 1

</llo_original>
